<compile_context>
chip_gen: v7x
topology: tpu7x:2x2x1
jax: 0.10.0
libtpu: 0.0.40
codegen_flags: <defaults>
</compile_context>

<pallas_src>
import functools

import jax
import jax.numpy as jnp
from jax import lax
from jax.experimental import pallas as pl
from jax.experimental.pallas import tpu as pltpu


def _round_up(x, m):
    return ((x + m - 1) // m) * m


def _pick_row_tile(n, cap=512):
    """Largest 16-aligned divisor of n up to `cap`; fall back to full extent."""
    if n <= cap:
        return n
    for cand in range(cap, 15, -1):
        if n % cand == 0 and cand % 16 == 0:
            return cand
    return n  # full-extent block (legal, just unaligned) — rare fallback


def vit_preprocess_kernel(p_ref, w_ref, b_ref, g_ref, pe_ref, o_ref, *, eps, d_real):
    # p_ref : (1, tn, K_pad)  bf16 patch rows for one (token-tile, batch)
    # w_ref : (K_pad, D_pad)  bf16 flattened conv weight (zero-padded, invariant)
    # b_ref : (1, D_pad)      f32 conv bias (zero-padded, invariant)
    # g_ref : (1, D_pad)      f32 RMSNorm weight (zero-padded, invariant)
    # pe_ref: (tn, D_pad)     bf16 pos-embed rows (VMEM-resident across batch)
    # o_ref : (1, tn, D)      output tile (real D; masked store if D % 128 != 0)
    x = jnp.dot(p_ref[0], w_ref[...], preferred_element_type=jnp.float32)
    x = x + b_ref[...]                                   # broadcast (1, D_pad)
    # RMSNorm over the *real* D columns.  Padded columns are exactly zero
    # (zero weight cols + zero bias), so summing over D_pad equals summing
    # over D; divide by the real D.
    ms = jnp.sum(x * x, axis=-1, keepdims=True) * (1.0 / d_real)
    x = x * lax.rsqrt(ms + eps)
    # f32 epilogue end-to-end: equivalent to PyTorch's cast-then-scale order
    # for f32 activations (bf16-rounding-level deviation otherwise).
    val = x * g_ref[...] + pe_ref[...].astype(jnp.float32)
    o_ref[0] = val[:, :d_real].astype(o_ref.dtype)


def vit_preprocess(x_nchw, conv_w, conv_b, rms_w, pos_embed, *,
                   patch_size, eps, out_dtype=None, tile_cap=512):
    """x_nchw: (B, C, H, W). pos_embed: (1, N_max, D) or (N_max, D). -> (B, N, D)."""
    B, C, H, W = x_nchw.shape
    D = conv_w.shape[0]
    p = patch_size
    hp, wp = H // p, W // p
    N = hp * wp
    K = C * p * p
    K_pad = _round_up(K, 128)
    D_pad = _round_up(D, 128)

    # Explicit activation dtype (don't inherit integer/uint8 image dtypes).
    if out_dtype is None:
        out_dtype = (x_nchw.dtype if jnp.issubdtype(x_nchw.dtype, jnp.floating)
                     else jnp.float32)
    out_dtype = jnp.dtype(out_dtype)

    tn = _pick_row_tile(N, tile_cap)
    n_tiles = N // tn

    # Conv-as-matmul patch extraction, inner ordering (c, kh, kw), in bf16.
    # TODO(synk): fuse this HBM->HBM relayout into the kernel via direct
    # (1, C, p, W) DMA blocks of x + in-VMEM reorder to remove the extra pass.
    xb = x_nchw.astype(jnp.bfloat16)
    patches = xb.reshape(B, C, hp, p, wp, p)
    patches = patches.transpose(0, 2, 4, 1, 3, 5).reshape(B, N, K)
    if K_pad != K:
        patches = jnp.pad(patches, ((0, 0), (0, 0), (0, K_pad - K)))

    w_mat = conv_w.reshape(D, K).T.astype(jnp.bfloat16)            # (K, D)
    w_mat = jnp.pad(w_mat, ((0, K_pad - K), (0, D_pad - D)))
    b_row = jnp.pad(conv_b.astype(jnp.float32).reshape(1, D),
                    ((0, 0), (0, D_pad - D)))
    g_row = jnp.pad(rms_w.astype(jnp.float32).reshape(1, D),
                    ((0, 0), (0, D_pad - D)))
    # Module semantics: pos_embed[:, :N].  Carried in bf16 (halves its stream).
    pe = pos_embed.reshape(-1, pos_embed.shape[-1])[:N].astype(jnp.bfloat16)
    pe = jnp.pad(pe, ((0, 0), (0, D_pad - D)))

    # Batch innermost -> pos_embed block index constant across consecutive
    # steps, so its tile is fetched once per token tile, not once per batch.
    grid = (n_tiles, B)

    out_bytes = B * N * D * out_dtype.itemsize
    bytes_accessed = (patches.size * 2 + w_mat.size * 2
                      + (b_row.size + g_row.size) * 4 + pe.size * 2 + out_bytes)
    cost = pl.CostEstimate(flops=2 * B * N * K_pad * D_pad,
                           transcendentals=B * N,
                           bytes_accessed=int(bytes_accessed))

    # Right-sized VMEM budget (v7x physical VMEM is only 64 MiB):
    # double-buffered tiles + invariant operands + headroom.
    tile_bytes = (2 * tn * K_pad * 2                 # patches (bf16)
                  + 2 * K_pad * D_pad * 2            # conv weight (bf16)
                  + 2 * 2 * D_pad * 4                # bias + gamma (f32)
                  + 2 * tn * D_pad * 2               # pos embed (bf16)
                  + 2 * tn * D * out_dtype.itemsize)  # output tile
    vmem_limit = int(min(max(tile_bytes + (4 << 20), 8 << 20), 64 << 20))

    out = pl.pallas_call(
        functools.partial(vit_preprocess_kernel, eps=eps, d_real=D),
        out_shape=jax.ShapeDtypeStruct((B, N, D), out_dtype),
        grid_spec=pltpu.PrefetchScalarGridSpec(
            num_scalar_prefetch=0,
            grid=grid,
            in_specs=[
                pl.BlockSpec((1, tn, K_pad), lambda j, b: (b, j, 0)),   # patches
                pl.BlockSpec((K_pad, D_pad), lambda j, b: (0, 0)),      # weight (invariant)
                pl.BlockSpec((1, D_pad), lambda j, b: (0, 0)),          # bias (invariant)
                pl.BlockSpec((1, D_pad), lambda j, b: (0, 0)),          # gamma (invariant)
                pl.BlockSpec((tn, D_pad), lambda j, b: (j, 0)),         # pos embed (resident over b)
            ],
            out_specs=pl.BlockSpec((1, tn, D), lambda j, b: (b, j, 0)),
        ),
        compiler_params=pltpu.CompilerParams(
            dimension_semantics=("parallel", "parallel"),
            vmem_limit_bytes=vmem_limit,
        ),
        cost_estimate=cost,
    )(patches, w_mat, b_row, g_row, pe)
    return out


def vit_preprocess_ref(x_nchw, conv_w, conv_b, rms_w, pos_embed, *, patch_size, eps):
    """Pure-JAX (fp32) reference matching the PyTorch module."""
    B, C, H, W = x_nchw.shape
    D = conv_w.shape[0]
    p = patch_size
    y = lax.conv_general_dilated(
        x_nchw, conv_w, window_strides=(p, p), padding="VALID",
        dimension_numbers=("NCHW", "OIHW", "NCHW"),
    ) + conv_b.reshape(1, D, 1, 1)
    y = y.reshape(B, D, -1).transpose(0, 2, 1)           # (B, N, D)
    N = y.shape[1]
    yf = y.astype(jnp.float32)
    ms = jnp.mean(yf * yf, axis=-1, keepdims=True)
    yn = (yf * lax.rsqrt(ms + eps)).astype(y.dtype)
    tokens = yn * rms_w
    pe = pos_embed.reshape(-1, D)[:N]
    return tokens + pe.reshape(1, N, D)


if __name__ == "__main__":
    # Small config consistent with the module: C=4, image=16, patch=8, D=32.
    B, C, H, W = 2, 4, 16, 16
    patch_size = 8
    hidden = 32
    eps = 1e-6
    N = (H // patch_size) * (W // patch_size)

    key = jax.random.PRNGKey(0)
    kx, kw, kb, kg, kp = jax.random.split(key, 5)
    x = jax.random.normal(kx, (B, C, H, W), dtype=jnp.float32)
    conv_w = jax.random.normal(kw, (hidden, C, patch_size, patch_size),
                               dtype=jnp.float32) * 0.02
    conv_b = jax.random.normal(kb, (hidden,), dtype=jnp.float32) * 0.01
    rms_w = 1.0 + 0.1 * jax.random.normal(kg, (hidden,), dtype=jnp.float32)
    # Module initializes pos_embed to zeros; use small random values here to
    # actually exercise the fused add.
    pos_embed = 0.02 * jax.random.normal(kp, (1, N, hidden), dtype=jnp.float32)

    out = vit_preprocess(x, conv_w, conv_b, rms_w, pos_embed,
                         patch_size=patch_size, eps=eps)
    out = jax.block_until_ready(out)

    ref = vit_preprocess_ref(x, conv_w, conv_b, rms_w, pos_embed,
                             patch_size=patch_size, eps=eps)
    assert out.shape == (B, N, hidden)
    # bf16 matmul operands / bf16 pos-embed -> ~1e-3-level deviation from fp32.
    assert jnp.allclose(out, ref, atol=2e-2, rtol=2e-2), "mismatch vs reference"

    print("KERNEL_OK")
</pallas_src>

<mosaic_0001>
module attributes {stable_mosaic.version = 11 : i64} {
  func.func @vit_preprocess_kernel(%arg0: i32, %arg1: i32, %arg2: memref<1x4x256xbf16, #tpu.memory_space<vmem>>, %arg3: memref<256x128xbf16, #tpu.memory_space<vmem>>, %arg4: memref<1x128xf32, #tpu.memory_space<vmem>>, %arg5: memref<1x128xf32, #tpu.memory_space<vmem>>, %arg6: memref<4x128xbf16, #tpu.memory_space<vmem>>, %arg7: memref<1x4x32xf32, #tpu.memory_space<vmem>>) attributes {dimension_semantics = [#tpu.dimension_semantics<parallel>, #tpu.dimension_semantics<parallel>], iteration_bounds = array<i64: 1, 2>, scalar_prefetch = 0 : i64, scratch_operands = 0 : i64, tpu.core_type = #tpu.core_type<tc>, window_params = [{transform_indices = @transform_0, window_bounds = array<i64: 1, 4, 256>}, {pipeline_mode = #tpu.pipeline_mode<synchronous>, transform_indices = @transform_1, window_bounds = array<i64: 256, 128>}, {pipeline_mode = #tpu.pipeline_mode<synchronous>, transform_indices = @transform_2, window_bounds = array<i64: 1, 128>}, {pipeline_mode = #tpu.pipeline_mode<synchronous>, transform_indices = @transform_3, window_bounds = array<i64: 1, 128>}, {transform_indices = @transform_4, window_bounds = array<i64: 4, 128>}, {transform_indices = @transform_5, window_bounds = array<i64: 1, 4, 32>}]} {
    %c0 = arith.constant 0 : index
    %c0_0 = arith.constant 0 : index
    %c0_1 = arith.constant 0 : index
    %0 = vector.load %arg2[%c0, %c0_0, %c0_1] : memref<1x4x256xbf16, #tpu.memory_space<vmem>>, vector<1x4x256xbf16>
    %1 = vector.shape_cast %0 : vector<1x4x256xbf16> to vector<4x256xbf16>
    %c0_2 = arith.constant 0 : index
    %c0_3 = arith.constant 0 : index
    %2 = vector.load %arg3[%c0_2, %c0_3] : memref<256x128xbf16, #tpu.memory_space<vmem>>, vector<256x128xbf16>
    %cst = arith.constant dense<0.000000e+00> : vector<4x128xf32>
    %3 = tpu.matmul %1, %2, %cst {dimension_numbers = #tpu.dot_dimension_numbers<[1], [0], [0], [1], [0, 0, 1, 1], [], []>} : vector<4x256xbf16>, vector<256x128xbf16>, vector<4x128xf32> -> vector<4x128xf32>
    %c0_4 = arith.constant 0 : index
    %c0_5 = arith.constant 0 : index
    %4 = vector.load %arg4[%c0_4, %c0_5] : memref<1x128xf32, #tpu.memory_space<vmem>>, vector<1x128xf32>
    %5 = vector.broadcast %4 : vector<1x128xf32> to vector<4x128xf32>
    %6 = arith.addf %3, %5 : vector<4x128xf32>
    %7 = arith.mulf %6, %6 : vector<4x128xf32>
    %cst_6 = arith.constant dense<0.000000e+00> : vector<4xf32>
    %8 = vector.multi_reduction <add>, %7, %cst_6 [1] : vector<4x128xf32> to vector<4xf32>
    %9 = vector.shape_cast %8 : vector<4xf32> to vector<4x1xf32>
    %cst_7 = arith.constant 3.125000e-02 : f32
    %10 = vector.broadcast %cst_7 : f32 to vector<4x1xf32>
    %11 = arith.mulf %9, %10 : vector<4x1xf32>
    %cst_8 = arith.constant 9.99999997E-7 : f32
    %12 = vector.broadcast %cst_8 : f32 to vector<4x1xf32>
    %13 = arith.addf %11, %12 : vector<4x1xf32>
    %14 = math.rsqrt %13 : vector<4x1xf32>
    %15 = vector.broadcast %14 : vector<4x1xf32> to vector<4x128xf32>
    %16 = arith.mulf %6, %15 : vector<4x128xf32>
    %c0_9 = arith.constant 0 : index
    %c0_10 = arith.constant 0 : index
    %17 = vector.load %arg5[%c0_9, %c0_10] : memref<1x128xf32, #tpu.memory_space<vmem>>, vector<1x128xf32>
    %18 = vector.broadcast %17 : vector<1x128xf32> to vector<4x128xf32>
    %19 = arith.mulf %16, %18 : vector<4x128xf32>
    %c0_11 = arith.constant 0 : index
    %c0_12 = arith.constant 0 : index
    %20 = vector.load %arg6[%c0_11, %c0_12] : memref<4x128xbf16, #tpu.memory_space<vmem>>, vector<4x128xbf16>
    %21 = arith.extf %20 : vector<4x128xbf16> to vector<4x128xf32>
    %22 = arith.addf %19, %21 : vector<4x128xf32>
    %23 = vector.extract_strided_slice %22 {offsets = [0, 0], sizes = [4, 32], strides = [1, 1]} : vector<4x128xf32> to vector<4x32xf32>
    %c0_13 = arith.constant 0 : index
    %c0_14 = arith.constant 0 : index
    %c0_15 = arith.constant 0 : index
    %24 = vector.load %arg7[%c0_13, %c0_14, %c0_15] : memref<1x4x32xf32, #tpu.memory_space<vmem>>, vector<1x4x32xf32>
    %25 = vector.shape_cast %24 : vector<1x4x32xf32> to vector<4x32xf32>
    %26 = vector.shape_cast %23 : vector<4x32xf32> to vector<1x4x32xf32>
    tpu.vector_store %arg7[%c0_13, %c0_14, %c0_15], %26 {strides = array<i32>} : memref<1x4x32xf32, #tpu.memory_space<vmem>>, vector<1x4x32xf32>,
    return
  }
  func.func @transform_0(%arg0: i32, %arg1: i32) -> (i32, i32, i32) {
    %c0_i32 = arith.constant 0 : i32
    %c0_i32_0 = arith.constant 0 : i32
    return %arg1, %arg0, %c0_i32 : i32, i32, i32
  }
  func.func @transform_1(%arg0: i32, %arg1: i32) -> (i32, i32) {
    %c0_i32 = arith.constant 0 : i32
    %c0_i32_0 = arith.constant 0 : i32
    %c0_i32_1 = arith.constant 0 : i32
    return %c0_i32, %c0_i32_0 : i32, i32
  }
  func.func @transform_2(%arg0: i32, %arg1: i32) -> (i32, i32) {
    %c0_i32 = arith.constant 0 : i32
    %c0_i32_0 = arith.constant 0 : i32
    %c0_i32_1 = arith.constant 0 : i32
    return %c0_i32, %c0_i32_0 : i32, i32
  }
  func.func @transform_3(%arg0: i32, %arg1: i32) -> (i32, i32) {
    %c0_i32 = arith.constant 0 : i32
    %c0_i32_0 = arith.constant 0 : i32
    %c0_i32_1 = arith.constant 0 : i32
    return %c0_i32, %c0_i32_0 : i32, i32
  }
  func.func @transform_4(%arg0: i32, %arg1: i32) -> (i32, i32) {
    %c0_i32 = arith.constant 0 : i32
    %c0_i32_0 = arith.constant 0 : i32
    return %arg0, %c0_i32 : i32, i32
  }
  func.func @transform_5(%arg0: i32, %arg1: i32) -> (i32, i32, i32) {
    %c0_i32 = arith.constant 0 : i32
    %c0_i32_0 = arith.constant 0 : i32
    return %arg1, %arg0, %c0_i32 : i32, i32, i32
  }
}

</mosaic_0001>

<llo_original>
// kernel: tpu_custom_call.1
$region0: #{tpu_custom_call.1}
  #allocation0 [shape = 'u32[]', space=smem, size = 0x4, offset = 0x4, fixed_abs, tag = 'smem constant byte address 0x4 - core index']
  #allocation1 [shape = 'u32[144,128]{1,0:T(1,128)}', space=vmem, size = 0x12000, scoped, tag = 'internal scratch']
  %s0 = inlined_call_operand.hbm [shape: bf16[2,4,256], index: 0, kind: input, shape index: {}]
  %s1 = inlined_call_operand.hbm [shape: bf16[256,128], index: 1, kind: input, shape index: {}]
  %s2 = inlined_call_operand.vmem [shape: f32[1,128], index: 2, kind: input, shape index: {}]
  %s3 = inlined_call_operand.vmem [shape: f32[1,128], index: 3, kind: input, shape index: {}]
  %s4 = inlined_call_operand.vmem [shape: bf16[4,128], index: 4, kind: input, shape index: {}]
  %s5 = inlined_call_operand.hbm [shape: f32[2,4,32], index: 5, kind: output, shape index: {}]
  %s6 = sld [smem:[#allocation0]]
  $region61: #{tpu_custom_call.1} parent=0
    _
  %s8 = ssub.s32 1, %s6
  %s9 = scalar_select 0, %s8, %s6
  $region1: #{tpu_custom_call.1} parent=0
    #allocation2 [shape = 'u8[4096]{0}', space=vmem, size = 0x1000, scoped, tag = 'input window, operand 0']
    #allocation3 [shape = 's32[2]{0}', space=sflag, size = 0x8, scoped, tag = 'scoped memory for tpu_custom_call.1']
    #allocation4 [shape = 's32[2]{0}', space=sflag, size = 0x8, scoped, tag = 'scoped memory for tpu_custom_call.1']
    #allocation5 [shape = 'u8[65536]{0}', space=vmem, size = 0x10000, scoped, tag = 'input window, operand 1, single buffered']
    #allocation6 [shape = 's32[1]{0}', space=sflag, size = 0x4, scoped, tag = 'scoped memory for tpu_custom_call.1']
    #allocation7 [shape = 'u8[4096]{0}', space=vmem, size = 0x1000, scoped, tag = 'output window, operand 0']
    %10 = vsyncpa [#allocation3], 0
    %s11 = scalar_lea.sflag [#allocation3], 1
    %12 = vsyncpa %s11, 0
    %13 = vsyncpa [#allocation6], 0
    %14 = vsyncpa [#allocation4], 0
    %s15 = scalar_lea.sflag [#allocation4], 1
    %16 = vsyncpa %s15, 0
    loop: start=0, step=1, limit=4
    $region2: #{tpu_custom_call.1} parent=1 // loop_pre_header
      _
    $region3: #{tpu_custom_call.1} parent=1 // loop_header
      %s18 = sphi 0, %s22
      %p19 = scmp.ge.s32.totalorder %s18, 4
      %s25 = sphi 0, %s37
      %s26 = sphi 0, %s33
      %s27 = sphi 0, %s25
      %s28 = sphi 0, %s26
      %s29 = sphi 0, %s27
      %s30 = sphi 0, %s28
      %s42 = sphi 0, %s44
      %s45 = sphi 0, %s42
      %s46 = sphi 0, %s45
      %s62 = sphi 0, %s46
      %s66 = sphi 0, %s66
      %s68 = sphi 0, %s66
      %s69 = sphi 0, %s68
      %s83 = sphi 0, %s69
      %s87 = sphi 0, %s87
      %s89 = sphi 0, %s87
      %s90 = sphi 0, %s89
      %s104 = sphi 0, %s90
      %s108 = sphi 0, %s108
      %s110 = sphi 0, %s108
      %s111 = sphi 0, %s110
      %s125 = sphi 0, %s111
      %s131 = sphi 0, %s133
      %s134 = sphi 0, %s131
      %s135 = sphi 0, %s134
      %s151 = sphi 0, %s135
      %s159 = sphi 0, %s161
      %s162 = sphi 0, %s159
      %s163 = sphi 0, %s162
      %s179 = sphi 0, %s163
    $region4: #{tpu_custom_call.1} parent=1 // loop_header_branch
      %21 = sbr.rel (%p19) target = $region8
    $region5: #{tpu_custom_call.1} parent=1 // loop_body
      %s23 = ssub.s32 %s18, 1
      %s24 = ssub.s32 %s18, 2
      %s31 = sadd.s32 1, %s26
      %p32 = scmp.ge.s32.totalorder %s31, 2
      %s33 = scalar_select %p32, 0, %s31
      %s34 = sadd.s32 1, %s25
      %s35 = scalar_select %p32, %s34, %s25
      %p36 = scmp.ge.s32.totalorder %s35, 1
      %s37 = scalar_select %p36, 0, %s35
      %s38 = ssub.s32 %s26, %s33
      %s39 = ssub.s32 %s25, %s37
      %s40 = sor.u32 %s38, %s39
      %p41 = scmp.eq.s32.totalorder %s40, 0
      %s43 = sadd.s32 %s42, 1
      %s44 = scalar_select %p41, %s42, %s43
      %p47 = pneg %p41
      %p48 = scmp.eq.s32.totalorder %s18, 1
      %p49 = por %p47, %p48
      %p50 = scmp.ne.s32.totalorder %s42, %s45
      %p51 = scmp.eq.s32.totalorder %s18, 0
      %p52 = por %p50, %p51
      %p53 = scmp.ne.s32.totalorder %s42, %s45
      %p54 = scmp.eq.s32.totalorder %s23, 1
      %p55 = por %p53, %p54
      %p56 = scmp.ne.s32.totalorder %s45, %s46
      %p57 = scmp.eq.s32.totalorder %s23, 0
      %p58 = por %p56, %p57
      %p59 = scmp.ne.s32.totalorder %s45, %s46
      %p60 = scmp.eq.s32.totalorder %s24, 1
      %p61 = por %p59, %p60
      %p63 = scmp.ne.s32.totalorder %s46, %s62
      %p64 = scmp.eq.s32.totalorder %s24, 0
      %p65 = por %p63, %p64
      %s67 = sadd.s32 %s66, 1
      %p70 = scmp.eq.s32.totalorder %s18, 1
      %p71 = scmp.ne.s32.totalorder %s66, %s68
      %p72 = scmp.eq.s32.totalorder %s18, 0
      %p73 = por %p71, %p72
      %p74 = scmp.ne.s32.totalorder %s66, %s68
      %p75 = scmp.eq.s32.totalorder %s23, 1
      %p76 = por %p74, %p75
      %p77 = scmp.ne.s32.totalorder %s68, %s69
      %p78 = scmp.eq.s32.totalorder %s23, 0
      %p79 = por %p77, %p78
      %p80 = scmp.ne.s32.totalorder %s68, %s69
      %p81 = scmp.eq.s32.totalorder %s24, 1
      %p82 = por %p80, %p81
      %p84 = scmp.ne.s32.totalorder %s69, %s83
      %p85 = scmp.eq.s32.totalorder %s24, 0
      %p86 = por %p84, %p85
      %s88 = sadd.s32 %s87, 1
      %p91 = scmp.eq.s32.totalorder %s18, 1
      %p92 = scmp.ne.s32.totalorder %s87, %s89
      %p93 = scmp.eq.s32.totalorder %s18, 0
      %p94 = por %p92, %p93
      %p95 = scmp.ne.s32.totalorder %s87, %s89
      %p96 = scmp.eq.s32.totalorder %s23, 1
      %p97 = por %p95, %p96
      %p98 = scmp.ne.s32.totalorder %s89, %s90
      %p99 = scmp.eq.s32.totalorder %s23, 0
      %p100 = por %p98, %p99
      %p101 = scmp.ne.s32.totalorder %s89, %s90
      %p102 = scmp.eq.s32.totalorder %s24, 1
      %p103 = por %p101, %p102
      %p105 = scmp.ne.s32.totalorder %s90, %s104
      %p106 = scmp.eq.s32.totalorder %s24, 0
      %p107 = por %p105, %p106
      %s109 = sadd.s32 %s108, 1
      %p112 = scmp.eq.s32.totalorder %s18, 1
      %p113 = scmp.ne.s32.totalorder %s108, %s110
      %p114 = scmp.eq.s32.totalorder %s18, 0
      %p115 = por %p113, %p114
      %p116 = scmp.ne.s32.totalorder %s108, %s110
      %p117 = scmp.eq.s32.totalorder %s23, 1
      %p118 = por %p116, %p117
      %p119 = scmp.ne.s32.totalorder %s110, %s111
      %p120 = scmp.eq.s32.totalorder %s23, 0
      %p121 = por %p119, %p120
      %p122 = scmp.ne.s32.totalorder %s110, %s111
      %p123 = scmp.eq.s32.totalorder %s24, 1
      %p124 = por %p122, %p123
      %p126 = scmp.ne.s32.totalorder %s111, %s125
      %p127 = scmp.eq.s32.totalorder %s24, 0
      %p128 = por %p126, %p127
      %s129 = ssub.s32 %s25, %s37
      %p130 = scmp.eq.s32.totalorder %s129, 0
      %s132 = sadd.s32 %s131, 1
      %s133 = scalar_select %p130, %s131, %s132
      %p136 = pneg %p130
      %p137 = scmp.eq.s32.totalorder %s18, 1
      %p138 = por %p136, %p137
      %p139 = scmp.ne.s32.totalorder %s131, %s134
      %p140 = scmp.eq.s32.totalorder %s18, 0
      %p141 = por %p139, %p140
      %p142 = scmp.ne.s32.totalorder %s131, %s134
      %p143 = scmp.eq.s32.totalorder %s23, 1
      %p144 = por %p142, %p143
      %p145 = scmp.ne.s32.totalorder %s134, %s135
      %p146 = scmp.eq.s32.totalorder %s23, 0
      %p147 = por %p145, %p146
      %p148 = scmp.ne.s32.totalorder %s134, %s135
      %p149 = scmp.eq.s32.totalorder %s24, 1
      %p150 = por %p148, %p149
      %p152 = scmp.ne.s32.totalorder %s135, %s151
      %p153 = scmp.eq.s32.totalorder %s24, 0
      %p154 = por %p152, %p153
      %s155 = ssub.s32 %s26, %s33
      %s156 = ssub.s32 %s25, %s37
      %s157 = sor.u32 %s155, %s156
      %p158 = scmp.eq.s32.totalorder %s157, 0
      %s160 = sadd.s32 %s159, 1
      %s161 = scalar_select %p158, %s159, %s160
      %p164 = pneg %p158
      %p165 = scmp.eq.s32.totalorder %s18, 1
      %p166 = por %p164, %p165
      %p167 = scmp.ne.s32.totalorder %s159, %s162
      %p168 = scmp.eq.s32.totalorder %s18, 0
      %p169 = por %p167, %p168
      %p170 = scmp.ne.s32.totalorder %s159, %s162
      %p171 = scmp.eq.s32.totalorder %s23, 1
      %p172 = por %p170, %p171
      %p173 = scmp.ne.s32.totalorder %s162, %s163
      %p174 = scmp.eq.s32.totalorder %s23, 0
      %p175 = por %p173, %p174
      %p176 = scmp.ne.s32.totalorder %s162, %s163
      %p177 = scmp.eq.s32.totalorder %s24, 1
      %p178 = por %p176, %p177
      %p180 = scmp.ne.s32.totalorder %s163, %s179
      %p181 = scmp.eq.s32.totalorder %s24, 0
      %p182 = por %p180, %p181
      %p183 = scmp.le.s32.totalorder 1, %s18
      %p184 = scmp.lt.s32.totalorder %s18, 3
      %p185 = pnand %p183, %p184
      %p186 = pneg %p185
      // Predicated region
      $region9: #{tpu_custom_call.1} parent=5 // pred_check
        _
      $region10: #{tpu_custom_call.1} parent=5 // pred_check_branch
        %188 = sbr.rel (%p185) target = $region12
      $region11: #{tpu_custom_call.1} parent=5 // pred_region
        %s189 = ssub.s32 %s18, 1
        // Predicated region
        $region13: #{tpu_custom_call.1} parent=11 // pred_check
          %p190 = pneg %p79
        $region14: #{tpu_custom_call.1} parent=11 // pred_check_branch
          %192 = sbr.rel (%p190) target = $region16
        $region15: #{tpu_custom_call.1} parent=11 // pred_region
          %s194 = ssub.s32 2048, 2048
          %195 = vsyncadd [#allocation6], %s194
          %s196 = sshll.u32 [#allocation5], 4
          %s197 = int_to_ptr.vmem [resolvable:$true] %s196
          %202 = dma.hbm_to_vmem [thread:$0]  %s1, 2048, %s197, [#allocation6], 64, 64, 4
        $region16: #{tpu_custom_call.1} parent=11 // pred_fallthru
          _
        // Predicated region
        $region17: #{tpu_custom_call.1} parent=11 // pred_check
          %p203 = pneg %p100
        $region18: #{tpu_custom_call.1} parent=11 // pred_check_branch
          %205 = sbr.rel (%p203) target = $region20
        $region19: #{tpu_custom_call.1} parent=11 // pred_region
          _
        $region20: #{tpu_custom_call.1} parent=11 // pred_fallthru
          _
        // Predicated region
        $region21: #{tpu_custom_call.1} parent=11 // pred_check
          %p206 = pneg %p121
        $region22: #{tpu_custom_call.1} parent=11 // pred_check_branch
          %208 = sbr.rel (%p206) target = $region24
        $region23: #{tpu_custom_call.1} parent=11 // pred_region
          _
        $region24: #{tpu_custom_call.1} parent=11 // pred_fallthru
          _
        // Predicated region
        $region25: #{tpu_custom_call.1} parent=11 // pred_check
          %p209 = pneg %p147
        $region26: #{tpu_custom_call.1} parent=11 // pred_check_branch
          %211 = sbr.rel (%p209) target = $region28
        $region27: #{tpu_custom_call.1} parent=11 // pred_region
          %p212 = scmp.lt.s32.totalorder %s27, 0
          %s213 = scalar_select %p212, %s27, 0
          %s214 = smul.addr %s213, 2
          %s215 = scalar_lea.vmem %s4, %s214
        $region28: #{tpu_custom_call.1} parent=11 // pred_fallthru
          _
      $region12: #{tpu_custom_call.1} parent=5 // pred_fallthru
        _
      %p216 = scmp.lt.s32.totalorder %s18, 2
      // Predicated region
      $region29: #{tpu_custom_call.1} parent=5 // pred_check
        %p217 = pneg %p216
      $region30: #{tpu_custom_call.1} parent=5 // pred_check_branch
        %219 = sbr.rel (%p217) target = $region32
      $region31: #{tpu_custom_call.1} parent=5 // pred_region
        // Predicated region
        $region33: #{tpu_custom_call.1} parent=31 // pred_check
          %p220 = pneg %p52
        $region34: #{tpu_custom_call.1} parent=31 // pred_check_branch
          %222 = sbr.rel (%p220) target = $region36
        $region35: #{tpu_custom_call.1} parent=31 // pred_region
          %s223 = sand.u32 %s42, 1
          %s224 = scalar_lea.sflag [#allocation3], %s223
          %s225 = sand.u32 %s42, 1
          %s226 = smul.addr %s225, 4
          %s227 = scalar_lea.vmem [#allocation2], %s226
          %s229 = ssub.s32 64, 64
          %230 = vsyncadd %s224, %s229
          %s231 = smul.addr %s25, 2
          %s232 = smul.addr %s26, 2
          %s233 = sadd.s32 %s231, %s232
          %s234 = smul.addr %s233, 32
          %s235 = scalar_lea.hbm %s0, %s234
          %s237 = sshll.u32 %s227, 4
          %s238 = int_to_ptr.vmem [resolvable:$true] %s237
          %240 = dma.hbm_to_vmem [thread:$0]  %s235, 64, %s238, %s224
        $region36: #{tpu_custom_call.1} parent=31 // pred_fallthru
          _
      $region32: #{tpu_custom_call.1} parent=5 // pred_fallthru
        _
      %p241 = scmp.le.s32.totalorder 1, %s18
      %p242 = scmp.lt.s32.totalorder %s18, 3
      %p243 = pnand %p241, %p242
      %p244 = pneg %p243
      // Predicated region
      $region37: #{tpu_custom_call.1} parent=5 // pred_check
        _
      $region38: #{tpu_custom_call.1} parent=5 // pred_check_branch
        %246 = sbr.rel (%p243) target = $region40
      $region39: #{tpu_custom_call.1} parent=5 // pred_region
        %s247 = ssub.s32 %s18, 1
        %s248 = sand.u32 %s45, 1
        %s249 = scalar_lea.sflag [#allocation3], %s248
        %s250 = sand.u32 %s45, 1
        %s251 = smul.addr %s250, 4
        %s252 = scalar_lea.vmem [#allocation2], %s251
        // Predicated region
        $region41: #{tpu_custom_call.1} parent=39 // pred_check
          %p253 = pneg %p58
        $region42: #{tpu_custom_call.1} parent=39 // pred_check_branch
          %255 = sbr.rel (%p253) target = $region44
        $region43: #{tpu_custom_call.1} parent=39 // pred_region
          %256 = dma.done %s249, 64
        $region44: #{tpu_custom_call.1} parent=39 // pred_fallthru
          _
        // Predicated region
        $region45: #{tpu_custom_call.1} parent=39 // pred_check
          %p257 = pneg %p79
        $region46: #{tpu_custom_call.1} parent=39 // pred_check_branch
          %259 = sbr.rel (%p257) target = $region48
        $region47: #{tpu_custom_call.1} parent=39 // pred_region
          %260 = dma.done [#allocation6], 2048
        $region48: #{tpu_custom_call.1} parent=39 // pred_fallthru
          _
        %s261 = sand.u32 %s45, 1
        %s262 = scalar_lea.sflag [#allocation3], %s261
        %s263 = sand.u32 %s45, 1
        %s264 = smul.addr %s263, 4
        %s265 = scalar_lea.vmem [#allocation2], %s264
        %p266 = pneg %p58
        %p267 = pneg %p55
        %p268 = pneg %p79
        %p269 = pneg %p76
        %p270 = pneg %p100
        %p271 = pneg %p97
        %p272 = pneg %p121
        %p273 = pneg %p118
        %p274 = scmp.lt.s32.totalorder %s27, 0
        %s275 = scalar_select %p274, %s27, 0
        %s276 = smul.addr %s275, 2
        %s277 = scalar_lea.vmem %s4, %s276
        %p278 = pneg %p147
        %p279 = pneg %p144
        %p280 = pneg %p175
        %p281 = pneg %p172
        %s282 = sand.u32 %s162, 1
        %s283 = scalar_lea.sflag [#allocation4], %s282
        %s284 = sand.u32 %s162, 1
        %s285 = smul.addr %s284, 4
        %s286 = scalar_lea.vmem [#allocation7], %s285
        %p287 = scmp.lt.s32.totalorder %s27, 0
        %s288 = scalar_select %p287, %s27, 0
        %s289 = smul.addr %s288, 2
        %s290 = scalar_lea.vmem %s4, %s289
        %v292 = vld [vmem:[%s252] sm:$0xf]
        %v293 = vld [vmem:[#allocation5] sm:$0xf]
        %v294 = vld [vmem:[#allocation5 + $0x4] sm:$0xf]
        %v295 = vld [vmem:[#allocation5 + $0x8] sm:$0xf]
        %v296 = vld [vmem:[#allocation5 + $0xc] sm:$0xf]
        %v297 = vld [vmem:[#allocation5 + $0x10] sm:$0xf]
        %v298 = vld [vmem:[#allocation5 + $0x14] sm:$0xf]
        %v299 = vld [vmem:[#allocation5 + $0x18] sm:$0xf]
        %v300 = vld [vmem:[#allocation5 + $0x1c] sm:$0xf]
        %v301 = vld [vmem:[#allocation5 + $0x20] sm:$0xf]
        %v302 = vld [vmem:[#allocation5 + $0x24] sm:$0xf]
        %v303 = vld [vmem:[#allocation5 + $0x28] sm:$0xf]
        %v304 = vld [vmem:[#allocation5 + $0x2c] sm:$0xf]
        %v305 = vld [vmem:[#allocation5 + $0x30] sm:$0xf]
        %v306 = vld [vmem:[#allocation5 + $0x34] sm:$0xf]
        %v307 = vld [vmem:[#allocation5 + $0x38] sm:$0xf]
        %v308 = vld [vmem:[#allocation5 + $0x3c] sm:$0xf]
        %v309 = vld [vmem:[#allocation5 + $0x40] sm:$0xf]
        %v310 = vld [vmem:[#allocation5 + $0x44] sm:$0xf]
        %v311 = vld [vmem:[#allocation5 + $0x48] sm:$0xf]
        %v312 = vld [vmem:[#allocation5 + $0x4c] sm:$0xf]
        %v313 = vld [vmem:[#allocation5 + $0x50] sm:$0xf]
        %v314 = vld [vmem:[#allocation5 + $0x54] sm:$0xf]
        %v315 = vld [vmem:[#allocation5 + $0x58] sm:$0xf]
        %v316 = vld [vmem:[#allocation5 + $0x5c] sm:$0xf]
        %v317 = vld [vmem:[#allocation5 + $0x60] sm:$0xf]
        %v318 = vld [vmem:[#allocation5 + $0x64] sm:$0xf]
        %v319 = vld [vmem:[#allocation5 + $0x68] sm:$0xf]
        %v320 = vld [vmem:[#allocation5 + $0x6c] sm:$0xf]
        %v321 = vld [vmem:[#allocation5 + $0x70] sm:$0xf]
        %v322 = vld [vmem:[#allocation5 + $0x74] sm:$0xf]
        %v323 = vld [vmem:[#allocation5 + $0x78] sm:$0xf]
        %v324 = vld [vmem:[#allocation5 + $0x7c] sm:$0xf]
        %v325 = vld [vmem:[%s2] sm:$0x1]
        %v327 = vlaneseq
        %v328 = vshrl.u32 %v327, 7
        %v329 = vsub.s32 0, %v328
        %v330 = vrot.slane %v325, %v329
        %v334 = vunpack.c.l.s4 1983009808
        %v335 = vunpack.c.0.s8 %v334
        %v336 = vlaneseq
        %v337 = vshrl.u32 %v336, 7
        %v338 = vsub.s32 %v335, %v337
        %v339 = vrot.slane %v292, %v338
        %v340 = vcombine.high %v339, %v339
        %v375 = vunpack.c.l.b16 %v293
        %v376 = vunpack.c.l.b16 %v294
        %v377 = vunpack.c.l.b16 %v295
        %v378 = vunpack.c.l.b16 %v296
        %v379 = vunpack.c.l.b16 %v297
        %v380 = vunpack.c.l.b16 %v298
        %v381 = vunpack.c.l.b16 %v299
        %v382 = vunpack.c.l.b16 %v300
        %v383 = vunpack.c.l.b16 %v301
        %v384 = vunpack.c.l.b16 %v302
        %v385 = vunpack.c.l.b16 %v303
        %v386 = vunpack.c.l.b16 %v304
        %v387 = vunpack.c.l.b16 %v305
        %v388 = vunpack.c.l.b16 %v306
        %v389 = vunpack.c.l.b16 %v307
        %v390 = vunpack.c.l.b16 %v308
        %v391 = vunpack.c.l.b16 %v309
        %v392 = vunpack.c.l.b16 %v310
        %v393 = vunpack.c.l.b16 %v311
        %v394 = vunpack.c.l.b16 %v312
        %v395 = vunpack.c.l.b16 %v313
        %v396 = vunpack.c.l.b16 %v314
        %v397 = vunpack.c.l.b16 %v315
        %v398 = vunpack.c.l.b16 %v316
        %v399 = vunpack.c.l.b16 %v317
        %v400 = vunpack.c.l.b16 %v318
        %v401 = vunpack.c.l.b16 %v319
        %v402 = vunpack.c.l.b16 %v320
        %v403 = vunpack.c.l.b16 %v321
        %v404 = vunpack.c.l.b16 %v322
        %v405 = vunpack.c.l.b16 %v323
        %v406 = vunpack.c.l.b16 %v324
        %v407 = vpack.c.b16 %v376, %v375
        %v408 = vpack.c.b16 %v378, %v377
        %v409 = vpack.c.b16 %v380, %v379
        %v410 = vpack.c.b16 %v382, %v381
        %v411 = vpack.c.b16 %v384, %v383
        %v412 = vpack.c.b16 %v386, %v385
        %v413 = vpack.c.b16 %v388, %v387
        %v414 = vpack.c.b16 %v390, %v389
        %v415 = vpack.c.b16 %v392, %v391
        %v416 = vpack.c.b16 %v394, %v393
        %v417 = vpack.c.b16 %v396, %v395
        %v418 = vpack.c.b16 %v398, %v397
        %v419 = vpack.c.b16 %v400, %v399
        %v420 = vpack.c.b16 %v402, %v401
        %v421 = vpack.c.b16 %v404, %v403
        %v422 = vpack.c.b16 %v406, %v405
        %439 = vmatprep.subr.bf16.mxu0 0
        %440 = vmatpush1.bf16.msra.mxu0 %v407
        %441 = vmatprep.subr.bf16.mxu0 0
        %442 = vmatpush1.bf16.msra.mxu0 %v408
        %443 = vmatprep.subr.bf16.mxu0 0
        %444 = vmatpush1.bf16.msra.mxu0 %v409
        %445 = vmatprep.subr.bf16.mxu0 0
        %446 = vmatpush1.bf16.msra.mxu0 %v410
        %447 = vmatprep.subr.bf16.mxu0 0
        %448 = vmatpush1.bf16.msra.mxu0 %v411
        %449 = vmatprep.subr.bf16.mxu0 0
        %450 = vmatpush1.bf16.msra.mxu0 %v412
        %451 = vmatprep.subr.bf16.mxu0 0
        %452 = vmatpush1.bf16.msra.mxu0 %v413
        %453 = vmatprep.subr.bf16.mxu0 0
        %454 = vmatpush1.bf16.msra.mxu0 %v414
        %455 = vmatprep.subr.bf16.mxu0 0
        %456 = vmatpush1.bf16.msra.mxu0 %v415
        %457 = vmatprep.subr.bf16.mxu0 0
        %458 = vmatpush1.bf16.msra.mxu0 %v416
        %459 = vmatprep.subr.bf16.mxu0 0
        %460 = vmatpush1.bf16.msra.mxu0 %v417
        %461 = vmatprep.subr.bf16.mxu0 0
        %462 = vmatpush1.bf16.msra.mxu0 %v418
        %463 = vmatprep.subr.bf16.mxu0 0
        %464 = vmatpush1.bf16.msra.mxu0 %v419
        %465 = vmatprep.subr.bf16.mxu0 0
        %466 = vmatpush1.bf16.msra.mxu0 %v420
        %467 = vmatprep.subr.bf16.mxu0 0
        %468 = vmatpush1.bf16.msra.mxu0 %v421
        %469 = vmatprep.subr.bf16.mxu0 0
        %470 = vmatpush1.bf16.msra.mxu0 %v422
        %471 = vmatprep.mubr.bf16.mxu0 %v340
        %472 = vmatmul.mubr.bf16.gmra.mrb[0].mxu0 %v339
        %v473 = vpop.f32.mrb[0].mxu0
        %v474 = vadd.f32 %v330, %v473
        %v475 = vpop.f32.mrb[0].mxu0
        %v476 = vpop.f32.mrb[0].mxu0
        %v477 = vpop.f32.mrb[0].mxu0
        %478 = vdwg.mxu0
        %v479 = vmul.f32 %v474, %v474
        %vm480 = vcmask 1043456
        %v481 = vsel %vm480, %v479, 0.0
        %482 = vadd.xlane.f32.xlu0 %v481
        %v483 = vpop.xlane.xlu0 %482
        %v484 = vmul.f32 %v483, 0.03125
        %v485 = vadd.f32 %v484, 1e-06
        %v486 = vrsqrt.pop %v485
        %v487 = vmul.f32 %v474, %v486
        %v488 = vld [vmem:[%s3] sm:$0x1]
        %v490 = vlaneseq
        %v491 = vshrl.u32 %v490, 7
        %v492 = vsub.s32 0, %v491
        %v493 = vrot.slane %v488, %v492
        %v495 = vmul.f32 %v487, %v493
        %v496 = vld [vmem:[%s290] sm:$0x3]
        %v497 = vunpack.c.l.bf16 %v496
        %v498 = vadd.f32 %v495, %v497
        %vm499 = vcmask 257024
        %500 = vst.msk [vmem:[%s286] sm:$0xf] %vm499, %v498
        %s501 = sand.u32 %s162, 1
        %s502 = scalar_lea.sflag [#allocation4], %s501
        %s503 = sand.u32 %s162, 1
        %s504 = smul.addr %s503, 4
        %s505 = scalar_lea.vmem [#allocation7], %s504
        // Predicated region
        $region49: #{tpu_custom_call.1} parent=39 // pred_check
          %p506 = pneg %p172
        $region50: #{tpu_custom_call.1} parent=39 // pred_check_branch
          %508 = sbr.rel (%p506) target = $region52
        $region51: #{tpu_custom_call.1} parent=39 // pred_region
          %s510 = ssub.s32 64, 64
          %511 = vsyncadd %s502, %s510
          %s512 = sadd.s32 %s27, %s28
          %s513 = smul.addr %s512, 64
          %s514 = scalar_lea.hbm %s5, %s513
          %s516 = sshll.u32 %s505, 4
          %s517 = int_to_ptr.vmem [resolvable:$true] %s516
          %519 = dma.vmem_to_hbm [thread:$0]  %s517, 64, %s514, %s502
        $region52: #{tpu_custom_call.1} parent=39 // pred_fallthru
          _
      $region40: #{tpu_custom_call.1} parent=5 // pred_fallthru
        _
      %p520 = scmp.le.s32.totalorder 2, %s18
      // Predicated region
      $region53: #{tpu_custom_call.1} parent=5 // pred_check
        %p521 = pneg %p520
      $region54: #{tpu_custom_call.1} parent=5 // pred_check_branch
        %523 = sbr.rel (%p521) target = $region56
      $region55: #{tpu_custom_call.1} parent=5 // pred_region
        %s524 = ssub.s32 %s18, 2
        // Predicated region
        $region57: #{tpu_custom_call.1} parent=55 // pred_check
          %p525 = pneg %p178
        $region58: #{tpu_custom_call.1} parent=55 // pred_check_branch
          %527 = sbr.rel (%p525) target = $region60
        $region59: #{tpu_custom_call.1} parent=55 // pred_region
          %s528 = sand.u32 %s163, 1
          %s529 = scalar_lea.sflag [#allocation4], %s528
          %s530 = sand.u32 %s163, 1
          %s531 = smul.addr %s530, 4
          %s532 = scalar_lea.vmem [#allocation7], %s531
          %533 = dma.done %s529, 64
        $region60: #{tpu_custom_call.1} parent=55 // pred_fallthru
          _
      $region56: #{tpu_custom_call.1} parent=5 // pred_fallthru
        _
    $region6: #{tpu_custom_call.1} parent=1 // loop_footer
      %s22 = sadd.s32 1, %s18
    $region7: #{tpu_custom_call.1} parent=1 // loop_footer_branch
      %17 = sbr.rel target = $region3
    $region8: #{tpu_custom_call.1} parent=1 // loop_exit
      _
    %534 = vsyncpa [#allocation3], 1
    %s535 = scalar_lea.sflag [#allocation3], 1
    %536 = vsyncpa %s535, 1
    %537 = vsyncpa [#allocation6], 1
    %538 = vsyncpa [#allocation4], 1
    %s539 = scalar_lea.sflag [#allocation4], 1
    %540 = vsyncpa %s539, 1

</llo_original>
